<compile_context>
chip_gen: v6e
topology: v6e:2x2x1
jax: 0.10.0
libtpu: 0.0.40
codegen_flags: <defaults>
</compile_context>

<pallas_src>
import functools

import jax
import jax.numpy as jnp
from jax.experimental import pallas as pl
from jax.experimental.pallas import tpu as pltpu


def _round_up(x, m):
    return ((x + m - 1) // m) * m


def _default_vmem_limit_bytes():
    """Per-generation VMEM budget, leaving headroom for Mosaic internals."""
    cap = 64 * 1024 * 1024
    try:
        info = pltpu.get_tpu_info()
        cap_attr = getattr(info, "vmem_capacity_bytes", None)
        if cap_attr:
            cap = int(cap_attr)
    except Exception:
        pass
    # v5e/v6e (128 MiB) -> 112 MiB; v7x (64 MiB) -> 48 MiB.
    return max(cap - 16 * 1024 * 1024, 32 * 1024 * 1024)


def _vmem_estimate(BC, BO, Vp, TV, lap_bytes, w_bytes, two_state):
    """Conservative footprint: assume every pipelined operand is
    double-buffered; persistent scratch counted once."""
    inputs = (BC * Vp * 4                                    # x (f32, resident)
              + (BC * Vp * lap_bytes if two_state else 0)    # x in matmul dtype
              + Vp * TV * lap_bytes                          # one 2*L^T tile
              + w_bytes
              + BO * 4)                                      # bias
    outputs = BO * Vp * 4                                    # resident accumulator
    scratch = 2 * BC * Vp * 4 + (2 * BC * Vp * lap_bytes if two_state else 0)
    return 2 * (inputs + outputs) + scratch


def _choose_tiling(V, BC, BO, lap_bytes, w_bytes, two_state, lane_tile,
                   vmem_limit, force_stream):
    """Pick (Vp, TV).  TV == Vp means 2*L^T is VMEM-resident (one DMA total);
    otherwise it is streamed in TV-wide contiguous lane tiles."""
    Vp128 = _round_up(max(V, 1), 128)
    if not force_stream and _vmem_estimate(
            BC, BO, Vp128, Vp128, lap_bytes, w_bytes, two_state) <= vmem_limit:
        return Vp128, Vp128                                  # resident-L path
    for tv in sorted({t for t in (lane_tile, 1024, 512, 256, 128)
                      if t <= lane_tile}, reverse=True):
        Vp = _round_up(max(V, 1), tv)
        if _vmem_estimate(BC, BO, Vp, tv, lap_bytes, w_bytes,
                          two_state) <= vmem_limit:
            return Vp, tv
    return _round_up(max(V, 1), 128), 128                    # last resort


def _project(w_ref, kidx, z, *, B, C, per_batch):
    """Order-k projection of the state slab z (B*C, T) -> (B*O, T)."""
    if per_batch:
        wk = w_ref[kidx]                                     # (O, C)
        parts = [jnp.dot(wk, z[b * C:(b + 1) * C, :],
                         preferred_element_type=jnp.float32)
                 for b in range(B)]
        return jnp.concatenate(parts, axis=0)                # (B*O, T)
    return jnp.dot(w_ref[kidx], z, preferred_element_type=jnp.float32)


def _graph_conv_kernel(*refs, K, TV, B, C, per_batch, two_state, single_tile):
    """One grid step = (Chebyshev step kk, lane tile j), K >= 2.

    x_ref    : (B*C, Vp)  f32   resident input slab (row = b*C + c)
    xmm_ref  : (B*C, Vp)  lap   matmul-dtype x (only when two_state)
    lt_ref   : (1, Vp, TV) lap  current contiguous lane tile of 2*L^T
    w_ref    : (K, B*O, B*C) or (K, O, C) f32 projection weights (resident)
    bias_ref : (B*O, 1)   f32
    out_ref  : (B*O, Vp)  f32   resident accumulator / output slab
    za, zb   : (B*C, Vp)  f32   ping-pong Chebyshev state Z_k = 2*T_k^T
    zma, zmb : (B*C, Vp)  lap   lap-dtype copies of the state (matmul LHS)
    """
    if two_state:
        (x_ref, xmm_ref, lt_ref, w_ref, bias_ref, out_ref,
         za, zb, zma, zmb) = refs
    else:
        x_ref, lt_ref, w_ref, bias_ref, out_ref, za, zb = refs
        xmm_ref, zma, zmb = x_ref, za, zb

    kk = pl.program_id(0)                       # Chebyshev step; order k = kk+1
    j = pl.program_id(1)                        # lane tile index
    if single_tile:
        js = slice(None)
    else:
        js = pl.ds(pl.multiple_of(j * TV, TV), TV)

    lt = lt_ref[0]                              # (Vp, TV) tile of 2*L^T

    def step(prev_mm_ref, minus, dst, dst_mm, base):
        # New state for THIS lane tile, its lap-dtype copy, and the fused
        # projection accumulate into the resident output (lane-dense store).
        z = jnp.dot(prev_mm_ref[...], lt, preferred_element_type=jnp.float32)
        if minus is not None:
            z = z - minus
        dst[:, js] = z
        if two_state:
            dst_mm[:, js] = z.astype(dst_mm.dtype)
        out_ref[:, js] = base + _project(w_ref, kk + 1, z, B=B, C=C,
                                         per_batch=per_batch)

    @pl.when(kk == 0)                           # k=0 init (+bias) fused with
    def _():                                    # k=1: Z1 = X @ 2L^T -> za
        base = _project(w_ref, 0, x_ref[:, js], B=B, C=C,
                        per_batch=per_batch) + bias_ref[...]
        step(xmm_ref, None, za, zma, base)

    if K > 2:
        @pl.when(kk == 1)                       # k=2: Z2 = Z1 @ 2L^T - 2X -> zb
        def _():
            step(zma, 2.0 * x_ref[:, js], zb, zmb, out_ref[:, js])

    if K > 3:
        # k >= 3: Z_k = Z_{k-1} @ 2L^T - Z_{k-2}; ping-pong by parity.
        @pl.when(jnp.logical_and(kk >= 2, kk % 2 == 0))   # prev zb -> write za
        def _():
            step(zmb, za[:, js], za, zma, out_ref[:, js])

        @pl.when(jnp.logical_and(kk >= 3, kk % 2 == 1))   # prev za -> write zb
        def _():
            step(zma, zb[:, js], zb, zmb, out_ref[:, js])


def _graph_conv_k1_kernel(x_ref, w_ref, bias_ref, out_ref, *, B, C, per_batch):
    """K == 1: pure projection, no Laplacian involved at all."""
    out_ref[...] = _project(w_ref, 0, x_ref[...], B=B, C=C,
                            per_batch=per_batch) + bias_ref[...]


def graph_conv(x, laplacian, weight, bias, kernel_size, *,
               lane_tile=512, lap_dtype=jnp.bfloat16,
               projection="auto", blockdiag_limit_bytes=2 * 1024 * 1024,
               vmem_limit_bytes=None, force_stream=False):
    """Pallas Graph_Conv forward.

    x         : (B, C, V) float32
    laplacian : (V, V)    float32 dense rescaled Laplacian
    weight    : (O, C*K)  float32 (torch nn.Linear weight layout)
    bias      : (O,)      float32
    returns   : (B, O, V) float32
    """
    B, C, V = x.shape
    O, CK = weight.shape
    K = int(kernel_size)
    assert K >= 1
    assert CK == C * K, (weight.shape, C, K)
    assert lane_tile % 128 == 0 and lane_tile >= 128

    if vmem_limit_bytes is None:
        vmem_limit_bytes = _default_vmem_limit_bytes()
    vmem_limit_bytes = int(vmem_limit_bytes)

    BC, BO = B * C, B * O
    lap_dtype = jnp.dtype(lap_dtype)
    two_state = (K > 1) and (lap_dtype != jnp.dtype(jnp.float32))
    lap_bytes = lap_dtype.itemsize if K > 1 else 0

    # ---- projection weights (wrapper-side layout glue) ----------------------
    # torch W[o, c*K + k] -> per-order (K, O, C); absorb the 0.5 of
    # Y_k = Z_k / 2 for k >= 1 (the recursion carries Z_k = 2*T_k^T).
    wk = jnp.transpose(weight.reshape(O, C, K), (2, 0, 1)).astype(jnp.float32)
    if K > 1:
        scale = jnp.concatenate([jnp.ones((1,), jnp.float32),
                                 jnp.full((K - 1,), 0.5, jnp.float32)])
        wk = wk * scale[:, None, None]

    if projection == "auto":
        per_batch = K * BO * BC * 4 > blockdiag_limit_bytes
    else:
        per_batch = (projection == "per_batch")
    if per_batch:
        w_arr = wk                                              # (K, O, C)
    else:
        eye_b = jnp.eye(B, dtype=jnp.float32)
        w_arr = jnp.einsum("koc,ab->kaobc", wk, eye_b).reshape(K, BO, BC)
    w_bytes = int(w_arr.size) * 4

    bias_col = jnp.tile(bias.astype(jnp.float32), B).reshape(BO, 1)

    # ---- tiling -------------------------------------------------------------
    Vp, TV = _choose_tiling(V, BC, BO, lap_bytes, w_bytes, two_state,
                            lane_tile, vmem_limit_bytes,
                            bool(force_stream) and K > 1)
    nj = Vp // TV

    x_slab = jnp.pad(x.reshape(BC, V).astype(jnp.float32),
                     ((0, 0), (0, Vp - V)))

    # ---- K == 1: projection only, no Laplacian ------------------------------
    if K == 1:
        kernel = functools.partial(_graph_conv_k1_kernel, B=B, C=C,
                                   per_batch=per_batch)
        out_slab = pl.pallas_call(
            kernel,
            out_shape=jax.ShapeDtypeStruct((BO, Vp), jnp.float32),
            grid_spec=pltpu.PrefetchScalarGridSpec(
                num_scalar_prefetch=0,
                grid=(nj,),
                in_specs=[
                    pl.BlockSpec((BC, TV), lambda j: (0, j)),
                    pl.BlockSpec(w_arr.shape, lambda j: (0,) * w_arr.ndim),
                    pl.BlockSpec((BO, 1), lambda j: (0, 0)),
                ],
                out_specs=pl.BlockSpec((BO, TV), lambda j: (0, j)),
            ),
            compiler_params=pltpu.CompilerParams(
                dimension_semantics=("parallel",),
                vmem_limit_bytes=vmem_limit_bytes),
        )(x_slab, w_arr, bias_col)
        return out_slab.reshape(B, O, Vp)[:, :, :V]

    # ---- K >= 2: Chebyshev recursion ----------------------------------------
    # 2*L^T, zero-padded, pre-tiled contiguously as (nj, Vp, TV) lane tiles so
    # each tile is one contiguous HBM slab (matters most on v5e DMA).
    lt2 = (2.0 * laplacian.astype(jnp.float32)).T
    lt2 = jnp.pad(lt2, ((0, Vp - V), (0, Vp - V)))
    lt_tiles = lt2.reshape(Vp, nj, TV).transpose(1, 0, 2).astype(lap_dtype)

    inputs = [x_slab]
    in_specs = [pl.BlockSpec((BC, Vp), lambda kk, j: (0, 0))]       # x resident
    if two_state:
        inputs.append(x_slab.astype(lap_dtype))                     # matmul-dtype x
        in_specs.append(pl.BlockSpec((BC, Vp), lambda kk, j: (0, 0)))
    inputs += [lt_tiles, w_arr, bias_col]
    in_specs += [
        # One contiguous (Vp, TV) tile of 2*L^T per (kk, j) step; when nj == 1
        # the block index is constant and L is DMAed exactly once (resident).
        pl.BlockSpec((1, Vp, TV), lambda kk, j: (j, 0, 0)),
        pl.BlockSpec(w_arr.shape, lambda kk, j: (0,) * w_arr.ndim),
        pl.BlockSpec((BO, 1), lambda kk, j: (0, 0)),
    ]

    scratch = [pltpu.VMEM((BC, Vp), jnp.float32),      # Z ping (f32 state)
               pltpu.VMEM((BC, Vp), jnp.float32)]      # Z pong
    if two_state:
        scratch += [pltpu.VMEM((BC, Vp), lap_dtype),   # lap-dtype MXU-LHS copies
                    pltpu.VMEM((BC, Vp), lap_dtype)]

    kernel = functools.partial(_graph_conv_kernel, K=K, TV=TV, B=B, C=C,
                               per_batch=per_batch, two_state=two_state,
                               single_tile=(nj == 1))
    out_slab = pl.pallas_call(
        kernel,
        out_shape=jax.ShapeDtypeStruct((BO, Vp), jnp.float32),
        grid_spec=pltpu.PrefetchScalarGridSpec(
            num_scalar_prefetch=0,
            grid=(K - 1, nj),
            in_specs=in_specs,
            out_specs=pl.BlockSpec((BO, Vp), lambda kk, j: (0, 0)),  # resident acc
            scratch_shapes=scratch,
        ),
        compiler_params=pltpu.CompilerParams(
            # Sequential: order k+1 needs the full state written across all
            # lane tiles of order k (per-core VMEM scratch).
            dimension_semantics=("arbitrary", "arbitrary"),
            vmem_limit_bytes=vmem_limit_bytes),
    )(*inputs)

    # (B*O, Vp) rows are already b-major -> (B, O, V) with no transpose.
    return out_slab.reshape(B, O, Vp)[:, :, :V]


def graph_conv_ref(x, laplacian, weight, bias, K):
    """Pure-JAX transcription of the PyTorch forward, for verification."""
    B, C, V = x.shape
    x0 = jnp.transpose(x, (2, 1, 0)).reshape(V, C * B)
    xs = [x0]
    if K > 1:
        xs.append(laplacian @ x0)
    for k in range(2, K):
        xs.append(2.0 * (laplacian @ xs[k - 1]) - xs[k - 2])
    xk = jnp.stack(xs, 0).reshape(K, V, C, B)
    xk = jnp.transpose(xk, (3, 1, 2, 0)).reshape(B * V, C * K)
    y = xk @ weight.T + bias
    return jnp.transpose(y.reshape(B, V, -1), (0, 2, 1))


def _make_case(key, B, C, V, K, O):
    k1, k2, k3, k4 = jax.random.split(key, 4)
    x = jax.random.normal(k1, (B, C, V), dtype=jnp.float32)
    # Deterministic synthetic "rescaled Laplacian": symmetric, ~unit spectrum.
    A = jax.random.normal(k2, (V, V), dtype=jnp.float32)
    lap = (A + A.T) / (2.0 * jnp.sqrt(float(V)))
    weight = jax.random.normal(k3, (O, C * K), dtype=jnp.float32) / jnp.sqrt(
        float(C * K))
    bias = 0.1 * jax.random.normal(k4, (O,), dtype=jnp.float32)
    return x, lap, weight, bias


if __name__ == "__main__":
    keys = jax.random.split(jax.random.PRNGKey(0), 4)

    # Case 1: small shapes consistent with the module (B=2, C=4, V=16, K=3,
    # O=8); f32 Laplacian, resident-L fast path, block-diagonal projection.
    B, C, V, K, O = 2, 4, 16, 3, 8
    x, lap, weight, bias = _make_case(keys[0], B, C, V, K, O)
    out = jax.block_until_ready(
        graph_conv(x, lap, weight, bias, K, lap_dtype=jnp.float32))
    ref = graph_conv_ref(x, lap, weight, bias, K)
    assert out.shape == (B, O, V), out.shape
    assert jnp.allclose(out, ref, atol=1e-3, rtol=1e-3), (
        float(jnp.max(jnp.abs(out - ref))))

    # Case 2: lane padding, forced streaming of L^T tiles, ping-pong scratch
    # (K=4) and the per-batch projection path; f32 Laplacian.
    B, C, V, K, O = 2, 3, 300, 4, 5
    x, lap, weight, bias = _make_case(keys[1], B, C, V, K, O)
    ref = graph_conv_ref(x, lap, weight, bias, K)
    out = jax.block_until_ready(
        graph_conv(x, lap, weight, bias, K, lap_dtype=jnp.float32,
                   lane_tile=128, force_stream=True, projection="per_batch"))
    assert out.shape == (B, O, V), out.shape
    assert jnp.allclose(out, ref, atol=1e-3, rtol=1e-3), (
        float(jnp.max(jnp.abs(out - ref))))

    # Case 3: default configuration (bf16 L operands, resident L, auto
    # projection); loose tolerance for bf16 rounding through the K=4
    # recursion (state and accumulation stay f32).
    out_bf16 = jax.block_until_ready(graph_conv(x, lap, weight, bias, K))
    err = float(jnp.max(jnp.abs(out_bf16 - ref)))
    assert err <= 0.08 * float(jnp.max(jnp.abs(ref))) + 0.05, err

    # Case 4: K == 1 (no Laplacian built or streamed at all).
    B, C, V, K, O = 2, 4, 16, 1, 8
    x, lap, weight, bias = _make_case(keys[2], B, C, V, K, O)
    out = jax.block_until_ready(
        graph_conv(x, lap, weight, bias, K, lap_dtype=jnp.float32))
    ref = graph_conv_ref(x, lap, weight, bias, K)
    assert out.shape == (B, O, V), out.shape
    assert jnp.allclose(out, ref, atol=1e-3, rtol=1e-3), (
        float(jnp.max(jnp.abs(out - ref))))

    # Case 5: K == 2 (only the fused k=0 / k=1 step exists).
    B, C, V, K, O = 2, 4, 16, 2, 8
    x, lap, weight, bias = _make_case(keys[3], B, C, V, K, O)
    out = jax.block_until_ready(
        graph_conv(x, lap, weight, bias, K, lap_dtype=jnp.float32))
    ref = graph_conv_ref(x, lap, weight, bias, K)
    assert jnp.allclose(out, ref, atol=1e-3, rtol=1e-3), (
        float(jnp.max(jnp.abs(out - ref))))

    print("KERNEL_OK")
</pallas_src>

<mosaic_0001>
module attributes {stable_mosaic.version = 11 : i64} {
  func.func @_graph_conv_kernel(%arg0: i32, %arg1: i32, %arg2: memref<8x128xf32, #tpu.memory_space<vmem>>, %arg3: memref<1x128x128xf32, #tpu.memory_space<vmem>>, %arg4: memref<3x16x8xf32, #tpu.memory_space<vmem>>, %arg5: memref<16x1xf32, #tpu.memory_space<vmem>>, %arg6: memref<16x128xf32, #tpu.memory_space<vmem>>, %arg7: memref<8x128xf32, #tpu.memory_space<vmem>>, %arg8: memref<8x128xf32, #tpu.memory_space<vmem>>) attributes {dimension_semantics = [#tpu.dimension_semantics<arbitrary>, #tpu.dimension_semantics<arbitrary>], iteration_bounds = array<i64: 2, 1>, scalar_prefetch = 0 : i64, scratch_operands = 2 : i64, tpu.core_type = #tpu.core_type<tc>, window_params = [{pipeline_mode = #tpu.pipeline_mode<synchronous>, transform_indices = @transform_0, window_bounds = array<i64: 8, 128>}, {transform_indices = @transform_1, window_bounds = array<i64: 1, 128, 128>}, {pipeline_mode = #tpu.pipeline_mode<synchronous>, transform_indices = @transform_2, window_bounds = array<i64: 3, 16, 8>}, {pipeline_mode = #tpu.pipeline_mode<synchronous>, transform_indices = @transform_3, window_bounds = array<i64: 16, 1>}, {pipeline_mode = #tpu.pipeline_mode<synchronous>, transform_indices = @transform_4, window_bounds = array<i64: 16, 128>}]} {
    %c0 = arith.constant 0 : index
    %c0_0 = arith.constant 0 : index
    %c0_1 = arith.constant 0 : index
    %0 = vector.load %arg3[%c0, %c0_0, %c0_1] : memref<1x128x128xf32, #tpu.memory_space<vmem>>, vector<1x128x128xf32>
    %1 = vector.shape_cast %0 : vector<1x128x128xf32> to vector<128x128xf32>
    %c0_i32 = arith.constant 0 : i32
    %2 = arith.cmpi eq, %arg0, %c0_i32 : i32
    %3 = arith.extui %2 : i1 to i32
    %c0_i32_2 = arith.constant 0 : i32
    %4 = arith.cmpi ne, %3, %c0_i32_2 : i32
    scf.if %4 {
      %c0_4 = arith.constant 0 : index
      %c0_5 = arith.constant 0 : index
      %8 = vector.load %arg2[%c0_4, %c0_5] : memref<8x128xf32, #tpu.memory_space<vmem>>, vector<8x128xf32>
      %c0_6 = arith.constant 0 : index
      %c0_7 = arith.constant 0 : index
      %c0_8 = arith.constant 0 : index
      %9 = vector.load %arg4[%c0_6, %c0_7, %c0_8] : memref<3x16x8xf32, #tpu.memory_space<vmem>>, vector<1x16x8xf32>
      %10 = vector.shape_cast %9 : vector<1x16x8xf32> to vector<16x8xf32>
      %cst = arith.constant dense<0.000000e+00> : vector<16x128xf32>
      %11 = tpu.matmul %10, %8, %cst {dimension_numbers = #tpu.dot_dimension_numbers<[1], [0], [0], [1], [0, 0, 1, 1], [], []>} : vector<16x8xf32>, vector<8x128xf32>, vector<16x128xf32> -> vector<16x128xf32>
      %c0_9 = arith.constant 0 : index
      %c0_10 = arith.constant 0 : index
      %12 = vector.load %arg5[%c0_9, %c0_10] : memref<16x1xf32, #tpu.memory_space<vmem>>, vector<16x1xf32>
      %13 = vector.broadcast %12 : vector<16x1xf32> to vector<16x128xf32>
      %14 = arith.addf %11, %13 : vector<16x128xf32>
      %c0_11 = arith.constant 0 : index
      %c0_12 = arith.constant 0 : index
      %15 = vector.load %arg2[%c0_11, %c0_12] : memref<8x128xf32, #tpu.memory_space<vmem>>, vector<8x128xf32>
      %cst_13 = arith.constant dense<0.000000e+00> : vector<8x128xf32>
      %16 = tpu.matmul %15, %1, %cst_13 {dimension_numbers = #tpu.dot_dimension_numbers<[1], [0], [0], [1], [0, 0, 1, 1], [], []>} : vector<8x128xf32>, vector<128x128xf32>, vector<8x128xf32> -> vector<8x128xf32>
      %c0_14 = arith.constant 0 : index
      %c0_15 = arith.constant 0 : index
      %17 = vector.load %arg7[%c0_14, %c0_15] : memref<8x128xf32, #tpu.memory_space<vmem>>, vector<8x128xf32>
      tpu.vector_store %arg7[%c0_14, %c0_15], %16 {strides = array<i32>} : memref<8x128xf32, #tpu.memory_space<vmem>>, vector<8x128xf32>,
      %c1_i32_16 = arith.constant 1 : i32
      %18 = arith.addi %arg0, %c1_i32_16 : i32
      %19 = arith.index_cast %18 : i32 to index
      %c0_17 = arith.constant 0 : index
      %c0_18 = arith.constant 0 : index
      %20 = vector.load %arg4[%19, %c0_17, %c0_18] : memref<3x16x8xf32, #tpu.memory_space<vmem>>, vector<1x16x8xf32>
      %21 = vector.shape_cast %20 : vector<1x16x8xf32> to vector<16x8xf32>
      %cst_19 = arith.constant dense<0.000000e+00> : vector<16x128xf32>
      %22 = tpu.matmul %21, %16, %cst_19 {dimension_numbers = #tpu.dot_dimension_numbers<[1], [0], [0], [1], [0, 0, 1, 1], [], []>} : vector<16x8xf32>, vector<8x128xf32>, vector<16x128xf32> -> vector<16x128xf32>
      %23 = arith.addf %14, %22 : vector<16x128xf32>
      %c0_20 = arith.constant 0 : index
      %c0_21 = arith.constant 0 : index
      %24 = vector.load %arg6[%c0_20, %c0_21] : memref<16x128xf32, #tpu.memory_space<vmem>>, vector<16x128xf32>
      tpu.vector_store %arg6[%c0_20, %c0_21], %23 {strides = array<i32>} : memref<16x128xf32, #tpu.memory_space<vmem>>, vector<16x128xf32>,
    } else {
    }
    %c1_i32 = arith.constant 1 : i32
    %5 = arith.cmpi eq, %arg0, %c1_i32 : i32
    %6 = arith.extui %5 : i1 to i32
    %c0_i32_3 = arith.constant 0 : i32
    %7 = arith.cmpi ne, %6, %c0_i32_3 : i32
    scf.if %7 {
      %c0_4 = arith.constant 0 : index
      %c0_5 = arith.constant 0 : index
      %8 = vector.load %arg2[%c0_4, %c0_5] : memref<8x128xf32, #tpu.memory_space<vmem>>, vector<8x128xf32>
      %cst = arith.constant 2.000000e+00 : f32
      %9 = vector.broadcast %cst : f32 to vector<8x128xf32>
      %10 = arith.mulf %9, %8 : vector<8x128xf32>
      %c0_6 = arith.constant 0 : index
      %c0_7 = arith.constant 0 : index
      %11 = vector.load %arg6[%c0_6, %c0_7] : memref<16x128xf32, #tpu.memory_space<vmem>>, vector<16x128xf32>
      %c0_8 = arith.constant 0 : index
      %c0_9 = arith.constant 0 : index
      %12 = vector.load %arg7[%c0_8, %c0_9] : memref<8x128xf32, #tpu.memory_space<vmem>>, vector<8x128xf32>
      %cst_10 = arith.constant dense<0.000000e+00> : vector<8x128xf32>
      %13 = tpu.matmul %12, %1, %cst_10 {dimension_numbers = #tpu.dot_dimension_numbers<[1], [0], [0], [1], [0, 0, 1, 1], [], []>} : vector<8x128xf32>, vector<128x128xf32>, vector<8x128xf32> -> vector<8x128xf32>
      %14 = arith.subf %13, %10 : vector<8x128xf32>
      %c0_11 = arith.constant 0 : index
      %c0_12 = arith.constant 0 : index
      %15 = vector.load %arg8[%c0_11, %c0_12] : memref<8x128xf32, #tpu.memory_space<vmem>>, vector<8x128xf32>
      tpu.vector_store %arg8[%c0_11, %c0_12], %14 {strides = array<i32>} : memref<8x128xf32, #tpu.memory_space<vmem>>, vector<8x128xf32>,
      %c1_i32_13 = arith.constant 1 : i32
      %16 = arith.addi %arg0, %c1_i32_13 : i32
      %17 = arith.index_cast %16 : i32 to index
      %c0_14 = arith.constant 0 : index
      %c0_15 = arith.constant 0 : index
      %18 = vector.load %arg4[%17, %c0_14, %c0_15] : memref<3x16x8xf32, #tpu.memory_space<vmem>>, vector<1x16x8xf32>
      %19 = vector.shape_cast %18 : vector<1x16x8xf32> to vector<16x8xf32>
      %cst_16 = arith.constant dense<0.000000e+00> : vector<16x128xf32>
      %20 = tpu.matmul %19, %14, %cst_16 {dimension_numbers = #tpu.dot_dimension_numbers<[1], [0], [0], [1], [0, 0, 1, 1], [], []>} : vector<16x8xf32>, vector<8x128xf32>, vector<16x128xf32> -> vector<16x128xf32>
      %21 = arith.addf %11, %20 : vector<16x128xf32>
      %c0_17 = arith.constant 0 : index
      %c0_18 = arith.constant 0 : index
      %22 = vector.load %arg6[%c0_17, %c0_18] : memref<16x128xf32, #tpu.memory_space<vmem>>, vector<16x128xf32>
      tpu.vector_store %arg6[%c0_17, %c0_18], %21 {strides = array<i32>} : memref<16x128xf32, #tpu.memory_space<vmem>>, vector<16x128xf32>,
    } else {
    }
    return
  }
  func.func @transform_0(%arg0: i32, %arg1: i32) -> (i32, i32) {
    %c0_i32 = arith.constant 0 : i32
    %c0_i32_0 = arith.constant 0 : i32
    %c0_i32_1 = arith.constant 0 : i32
    return %c0_i32, %c0_i32_0 : i32, i32
  }
  func.func @transform_1(%arg0: i32, %arg1: i32) -> (i32, i32, i32) {
    %c0_i32 = arith.constant 0 : i32
    %c0_i32_0 = arith.constant 0 : i32
    %c0_i32_1 = arith.constant 0 : i32
    return %arg1, %c0_i32, %c0_i32_0 : i32, i32, i32
  }
  func.func @transform_2(%arg0: i32, %arg1: i32) -> (i32, i32, i32) {
    %c0_i32 = arith.constant 0 : i32
    %c0_i32_0 = arith.constant 0 : i32
    %c0_i32_1 = arith.constant 0 : i32
    %c0_i32_2 = arith.constant 0 : i32
    return %c0_i32, %c0_i32_0, %c0_i32_1 : i32, i32, i32
  }
  func.func @transform_3(%arg0: i32, %arg1: i32) -> (i32, i32) {
    %c0_i32 = arith.constant 0 : i32
    %c0_i32_0 = arith.constant 0 : i32
    %c0_i32_1 = arith.constant 0 : i32
    return %c0_i32, %c0_i32_0 : i32, i32
  }
  func.func @transform_4(%arg0: i32, %arg1: i32) -> (i32, i32) {
    %c0_i32 = arith.constant 0 : i32
    %c0_i32_0 = arith.constant 0 : i32
    %c0_i32_1 = arith.constant 0 : i32
    return %c0_i32, %c0_i32_0 : i32, i32
  }
}

</mosaic_0001>

<llo_original>
// kernel: tpu_custom_call.1
$region0: #{tpu_custom_call.1}
  #allocation0 [shape = 'u32[]', space=smem, size = 0x4, offset = 0x4, fixed_abs, tag = 'smem constant byte address 0x4 - core index']
  #allocation1 [shape = 'u32[144,128]{1,0:T(1,128)}', space=vmem, size = 0x12000, scoped, tag = 'internal scratch']
  #allocation2 [shape = 'f32[8,128]{1,0:T(8,128)}', space=vmem, size = 0x1000, scoped, tag = 'scratch operand']
  #allocation3 [shape = 'f32[8,128]{1,0:T(8,128)}', space=vmem, size = 0x1000, scoped, tag = 'scratch operand']
  %s0 = inlined_call_operand.vmem [shape: f32[8,128], index: 0, kind: input, shape index: {}]
  %s1 = inlined_call_operand.hbm [shape: f32[1,128,128], index: 1, kind: input, shape index: {}]
  %s2 = inlined_call_operand.vmem [shape: f32[3,16,8], index: 2, kind: input, shape index: {}]
  %s3 = inlined_call_operand.vmem [shape: f32[16,1], index: 3, kind: input, shape index: {}]
  %s4 = inlined_call_operand.hbm [shape: f32[16,128], index: 4, kind: output, shape index: {}]
  %s5 = sld [smem:[#allocation0]]
  $region61: #{tpu_custom_call.1} parent=0
    _
  %s7 = ssub.s32 1, %s5
  %s8 = scalar_select 0, %s7, %s5
  $region1: #{tpu_custom_call.1} parent=0
    #allocation4 [shape = 'u8[65536]{0}', space=vmem, size = 0x10000, scoped, tag = 'input window, operand 1, single buffered']
    #allocation5 [shape = 's32[2]{0}', space=sflag, size = 0x8, scoped, tag = 'scoped memory for tpu_custom_call.1']
    #allocation6 [shape = 's32[2]{0}', space=sflag, size = 0x8, scoped, tag = 'scoped memory for tpu_custom_call.1']
    #allocation7 [shape = 'u8[8192]{0}', space=vmem, size = 0x2000, scoped, tag = 'output window, operand 0, single buffered']
    %9 = vsyncpa [#allocation5], 0
    %10 = vsyncpa [#allocation6], 0
    loop: start=0, step=1, limit=4
    $region2: #{tpu_custom_call.1} parent=1 // loop_pre_header
      _
    $region3: #{tpu_custom_call.1} parent=1 // loop_header
      %s12 = sphi 0, %s16
      %p13 = scmp.ge.s32.totalorder %s12, 4
      %s19 = sphi 0, %s31
      %s20 = sphi 0, %s27
      %s21 = sphi 0, %s19
      %s22 = sphi 0, %s20
      %s23 = sphi 0, %s21
      %s24 = sphi 0, %s22
      %s32 = sphi 0, %s32
      %s34 = sphi 0, %s32
      %s35 = sphi 0, %s34
      %s49 = sphi 0, %s35
      %s55 = sphi 0, %s57
      %s58 = sphi 0, %s55
      %s59 = sphi 0, %s58
      %s75 = sphi 0, %s59
      %s79 = sphi 0, %s79
      %s81 = sphi 0, %s79
      %s82 = sphi 0, %s81
      %s96 = sphi 0, %s82
      %s100 = sphi 0, %s100
      %s102 = sphi 0, %s100
      %s103 = sphi 0, %s102
      %s117 = sphi 0, %s103
      %s121 = sphi 0, %s121
      %s123 = sphi 0, %s121
      %s124 = sphi 0, %s123
      %s138 = sphi 0, %s124
    $region4: #{tpu_custom_call.1} parent=1 // loop_header_branch
      %15 = sbr.rel (%p13) target = $region8
    $region5: #{tpu_custom_call.1} parent=1 // loop_body
      %s17 = ssub.s32 %s12, 1
      %s18 = ssub.s32 %s12, 2
      %s25 = sadd.s32 1, %s20
      %p26 = scmp.ge.s32.totalorder %s25, 1
      %s27 = scalar_select %p26, 0, %s25
      %s28 = sadd.s32 1, %s19
      %s29 = scalar_select %p26, %s28, %s19
      %p30 = scmp.ge.s32.totalorder %s29, 2
      %s31 = scalar_select %p30, 0, %s29
      %s33 = sadd.s32 %s32, 1
      %p36 = scmp.eq.s32.totalorder %s12, 1
      %p37 = scmp.ne.s32.totalorder %s32, %s34
      %p38 = scmp.eq.s32.totalorder %s12, 0
      %p39 = por %p37, %p38
      %p40 = scmp.ne.s32.totalorder %s32, %s34
      %p41 = scmp.eq.s32.totalorder %s17, 1
      %p42 = por %p40, %p41
      %p43 = scmp.ne.s32.totalorder %s34, %s35
      %p44 = scmp.eq.s32.totalorder %s17, 0
      %p45 = por %p43, %p44
      %p46 = scmp.ne.s32.totalorder %s34, %s35
      %p47 = scmp.eq.s32.totalorder %s18, 1
      %p48 = por %p46, %p47
      %p50 = scmp.ne.s32.totalorder %s35, %s49
      %p51 = scmp.eq.s32.totalorder %s18, 0
      %p52 = por %p50, %p51
      %s53 = ssub.s32 %s20, %s27
      %p54 = scmp.eq.s32.totalorder %s53, 0
      %s56 = sadd.s32 %s55, 1
      %s57 = scalar_select %p54, %s55, %s56
      %p60 = pneg %p54
      %p61 = scmp.eq.s32.totalorder %s12, 1
      %p62 = por %p60, %p61
      %p63 = scmp.ne.s32.totalorder %s55, %s58
      %p64 = scmp.eq.s32.totalorder %s12, 0
      %p65 = por %p63, %p64
      %p66 = scmp.ne.s32.totalorder %s55, %s58
      %p67 = scmp.eq.s32.totalorder %s17, 1
      %p68 = por %p66, %p67
      %p69 = scmp.ne.s32.totalorder %s58, %s59
      %p70 = scmp.eq.s32.totalorder %s17, 0
      %p71 = por %p69, %p70
      %p72 = scmp.ne.s32.totalorder %s58, %s59
      %p73 = scmp.eq.s32.totalorder %s18, 1
      %p74 = por %p72, %p73
      %p76 = scmp.ne.s32.totalorder %s59, %s75
      %p77 = scmp.eq.s32.totalorder %s18, 0
      %p78 = por %p76, %p77
      %s80 = sadd.s32 %s79, 1
      %p83 = scmp.eq.s32.totalorder %s12, 1
      %p84 = scmp.ne.s32.totalorder %s79, %s81
      %p85 = scmp.eq.s32.totalorder %s12, 0
      %p86 = por %p84, %p85
      %p87 = scmp.ne.s32.totalorder %s79, %s81
      %p88 = scmp.eq.s32.totalorder %s17, 1
      %p89 = por %p87, %p88
      %p90 = scmp.ne.s32.totalorder %s81, %s82
      %p91 = scmp.eq.s32.totalorder %s17, 0
      %p92 = por %p90, %p91
      %p93 = scmp.ne.s32.totalorder %s81, %s82
      %p94 = scmp.eq.s32.totalorder %s18, 1
      %p95 = por %p93, %p94
      %p97 = scmp.ne.s32.totalorder %s82, %s96
      %p98 = scmp.eq.s32.totalorder %s18, 0
      %p99 = por %p97, %p98
      %s101 = sadd.s32 %s100, 1
      %p104 = scmp.eq.s32.totalorder %s12, 1
      %p105 = scmp.ne.s32.totalorder %s100, %s102
      %p106 = scmp.eq.s32.totalorder %s12, 0
      %p107 = por %p105, %p106
      %p108 = scmp.ne.s32.totalorder %s100, %s102
      %p109 = scmp.eq.s32.totalorder %s17, 1
      %p110 = por %p108, %p109
      %p111 = scmp.ne.s32.totalorder %s102, %s103
      %p112 = scmp.eq.s32.totalorder %s17, 0
      %p113 = por %p111, %p112
      %p114 = scmp.ne.s32.totalorder %s102, %s103
      %p115 = scmp.eq.s32.totalorder %s18, 1
      %p116 = por %p114, %p115
      %p118 = scmp.ne.s32.totalorder %s103, %s117
      %p119 = scmp.eq.s32.totalorder %s18, 0
      %p120 = por %p118, %p119
      %s122 = sadd.s32 %s121, 1
      %p125 = scmp.eq.s32.totalorder %s12, 1
      %p126 = scmp.ne.s32.totalorder %s121, %s123
      %p127 = scmp.eq.s32.totalorder %s12, 0
      %p128 = por %p126, %p127
      %p129 = scmp.ne.s32.totalorder %s121, %s123
      %p130 = scmp.eq.s32.totalorder %s17, 1
      %p131 = por %p129, %p130
      %p132 = scmp.ne.s32.totalorder %s123, %s124
      %p133 = scmp.eq.s32.totalorder %s17, 0
      %p134 = por %p132, %p133
      %p135 = scmp.ne.s32.totalorder %s123, %s124
      %p136 = scmp.eq.s32.totalorder %s18, 1
      %p137 = por %p135, %p136
      %p139 = scmp.ne.s32.totalorder %s124, %s138
      %p140 = scmp.eq.s32.totalorder %s18, 0
      %p141 = por %p139, %p140
      %p142 = scmp.le.s32.totalorder 1, %s12
      %p143 = scmp.lt.s32.totalorder %s12, 3
      %p144 = pnand %p142, %p143
      %p145 = pneg %p144
      // Predicated region
      $region9: #{tpu_custom_call.1} parent=5 // pred_check
        _
      $region10: #{tpu_custom_call.1} parent=5 // pred_check_branch
        %147 = sbr.rel (%p144) target = $region12
      $region11: #{tpu_custom_call.1} parent=5 // pred_region
        %s148 = ssub.s32 %s12, 1
        // Predicated region
        $region13: #{tpu_custom_call.1} parent=11 // pred_check
          %p149 = pneg %p45
        $region14: #{tpu_custom_call.1} parent=11 // pred_check_branch
          %151 = sbr.rel (%p149) target = $region16
        $region15: #{tpu_custom_call.1} parent=11 // pred_region
          _
        $region16: #{tpu_custom_call.1} parent=11 // pred_fallthru
          _
        // Predicated region
        $region17: #{tpu_custom_call.1} parent=11 // pred_check
          %p152 = pneg %p71
        $region18: #{tpu_custom_call.1} parent=11 // pred_check_branch
          %154 = sbr.rel (%p152) target = $region20
        $region19: #{tpu_custom_call.1} parent=11 // pred_region
          %s156 = ssub.s32 2048, 2048
          %157 = vsyncadd [#allocation5], %s156
          %s158 = smul.addr %s22, 16
          %s159 = smul.addr %s158, 128
          %s160 = scalar_lea.hbm %s1, %s159
          %s161 = sshll.u32 [#allocation4], 4
          %s162 = int_to_ptr.vmem [resolvable:$true] %s161
          %167 = dma.hbm_to_vmem [thread:$0]  %s160, 2048, %s162, [#allocation5], 128, 128, 8
        $region20: #{tpu_custom_call.1} parent=11 // pred_fallthru
          _
        // Predicated region
        $region21: #{tpu_custom_call.1} parent=11 // pred_check
          %p168 = pneg %p92
        $region22: #{tpu_custom_call.1} parent=11 // pred_check_branch
          %170 = sbr.rel (%p168) target = $region24
        $region23: #{tpu_custom_call.1} parent=11 // pred_region
          _
        $region24: #{tpu_custom_call.1} parent=11 // pred_fallthru
          _
        // Predicated region
        $region25: #{tpu_custom_call.1} parent=11 // pred_check
          %p171 = pneg %p113
        $region26: #{tpu_custom_call.1} parent=11 // pred_check_branch
          %173 = sbr.rel (%p171) target = $region28
        $region27: #{tpu_custom_call.1} parent=11 // pred_region
          _
        $region28: #{tpu_custom_call.1} parent=11 // pred_fallthru
          _
      $region12: #{tpu_custom_call.1} parent=5 // pred_fallthru
        _
      %p174 = scmp.lt.s32.totalorder %s12, 2
      // Predicated region
      $region29: #{tpu_custom_call.1} parent=5 // pred_check
        %p175 = pneg %p174
      $region30: #{tpu_custom_call.1} parent=5 // pred_check_branch
        %177 = sbr.rel (%p175) target = $region32
      $region31: #{tpu_custom_call.1} parent=5 // pred_region
        _
      $region32: #{tpu_custom_call.1} parent=5 // pred_fallthru
        _
      %p178 = scmp.le.s32.totalorder 1, %s12
      %p179 = scmp.lt.s32.totalorder %s12, 3
      %p180 = pnand %p178, %p179
      %p181 = pneg %p180
      // Predicated region
      $region33: #{tpu_custom_call.1} parent=5 // pred_check
        _
      $region34: #{tpu_custom_call.1} parent=5 // pred_check_branch
        %183 = sbr.rel (%p180) target = $region36
      $region35: #{tpu_custom_call.1} parent=5 // pred_region
        %s184 = ssub.s32 %s12, 1
        // Predicated region
        $region37: #{tpu_custom_call.1} parent=35 // pred_check
          %p185 = pneg %p71
        $region38: #{tpu_custom_call.1} parent=35 // pred_check_branch
          %187 = sbr.rel (%p185) target = $region40
        $region39: #{tpu_custom_call.1} parent=35 // pred_region
          %188 = dma.done [#allocation5], 2048
        $region40: #{tpu_custom_call.1} parent=35 // pred_fallthru
          _
        %p189 = pneg %p45
        %p190 = pneg %p42
        %p191 = pneg %p71
        %p192 = pneg %p68
        %p193 = pneg %p92
        %p194 = pneg %p89
        %p195 = pneg %p113
        %p196 = pneg %p110
        %p197 = pneg %p134
        %p198 = pneg %p131
        %v199 = vld [vmem:[#allocation4] sm:$0xff]
        %v200 = vld [vmem:[#allocation4 + $0x8] sm:$0xff]
        %v201 = vld [vmem:[#allocation4 + $0x10] sm:$0xff]
        %v202 = vld [vmem:[#allocation4 + $0x18] sm:$0xff]
        %v203 = vld [vmem:[#allocation4 + $0x20] sm:$0xff]
        %v204 = vld [vmem:[#allocation4 + $0x28] sm:$0xff]
        %v205 = vld [vmem:[#allocation4 + $0x30] sm:$0xff]
        %v206 = vld [vmem:[#allocation4 + $0x38] sm:$0xff]
        %v207 = vld [vmem:[#allocation4 + $0x40] sm:$0xff]
        %v208 = vld [vmem:[#allocation4 + $0x48] sm:$0xff]
        %v209 = vld [vmem:[#allocation4 + $0x50] sm:$0xff]
        %v210 = vld [vmem:[#allocation4 + $0x58] sm:$0xff]
        %v211 = vld [vmem:[#allocation4 + $0x60] sm:$0xff]
        %v212 = vld [vmem:[#allocation4 + $0x68] sm:$0xff]
        %v213 = vld [vmem:[#allocation4 + $0x70] sm:$0xff]
        %v214 = vld [vmem:[#allocation4 + $0x78] sm:$0xff]
        %p215 = scmp.eq.s32.totalorder %s21, 0
        // Predicated region
        $region41: #{tpu_custom_call.1} parent=35 // pred_check
          %p216 = pneg %p215
        $region42: #{tpu_custom_call.1} parent=35 // pred_check_branch
          %218 = sbr.rel (%p216) target = $region44
        $region43: #{tpu_custom_call.1} parent=35 // pred_region
          %v219 = vld [vmem:[%s0] sm:$0xff]
          %v220 = vld [vmem:[%s2] sm:$0xff]
          %v221 = vld [vmem:[%s2 + $0x8] sm:$0xff]
          %v222 = vld [vmem:[%s3] sm:$0xff]
          %v223 = vld [vmem:[%s3 + $0x8] sm:$0xff]
          %225 = vset.pattern.permute.xlu0 0
          %226 = vperm.xlu0 %225, %v222
          %v227 = vpop.permute.xlu0 %226
          %230 = vset.pattern.permute.xlu0 0
          %231 = vperm.xlu0 %230, %v223
          %v232 = vpop.permute.xlu0 %231
          %vm234 = vcmask 64512
          %v236 = vsel %vm234, %v220, 0
          %v239 = vsel %vm234, %v221, 0
          %241 = vmatprep.subr.mxu0 0.0
          %242 = vmatpush1.msra.mxu0 0.0
          %243 = vmatprep.subr.mxu0 0.0
          %244 = vmatpush1.msra.mxu0 0.0
          %245 = vmatprep.subr.mxu0 0.0
          %246 = vmatpush1.msra.mxu0 0.0
          %247 = vmatprep.subr.mxu0 0.0
          %248 = vmatpush1.msra.mxu0 0.0
          %249 = vmatprep.subr.mxu0 0.0
          %250 = vmatpush1.msra.mxu0 0.0
          %251 = vmatprep.subr.mxu0 0.0
          %252 = vmatpush1.msra.mxu0 0.0
          %253 = vmatprep.subr.mxu0 0.0
          %254 = vmatpush1.msra.mxu0 0.0
          %255 = vmatprep.subr.mxu0 0.0
          %256 = vmatpush1.msra.mxu0 0.0
          %257 = vmatprep.subr.mxu0 0.0
          %258 = vmatpush1.msra.mxu0 0.0
          %259 = vmatprep.subr.mxu0 0.0
          %260 = vmatpush1.msra.mxu0 0.0
          %261 = vmatprep.subr.mxu0 0.0
          %262 = vmatpush1.msra.mxu0 0.0
          %263 = vmatprep.subr.mxu0 0.0
          %264 = vmatpush1.msra.mxu0 0.0
          %265 = vmatprep.subr.mxu0 0.0
          %266 = vmatpush1.msra.mxu0 0.0
          %267 = vmatprep.subr.mxu0 0.0
          %268 = vmatpush1.msra.mxu0 0.0
          %269 = vmatprep.subr.mxu0 0.0
          %270 = vmatpush1.msra.mxu0 0.0
          %271 = vmatprep.subr.mxu0 0.0
          %272 = vmatpush1.msra.mxu0 %v219
          %273 = vmatprep.subr.mxu0 0.0
          %274 = vmatpush2.msra.mxu0 0.0
          %275 = vmatprep.subr.mxu0 0.0
          %276 = vmatpush2.msra.mxu0 0.0
          %277 = vmatprep.subr.mxu0 0.0
          %278 = vmatpush2.msra.mxu0 0.0
          %279 = vmatprep.subr.mxu0 0.0
          %280 = vmatpush2.msra.mxu0 0.0
          %281 = vmatprep.subr.mxu0 0.0
          %282 = vmatpush2.msra.mxu0 0.0
          %283 = vmatprep.subr.mxu0 0.0
          %284 = vmatpush2.msra.mxu0 0.0
          %285 = vmatprep.subr.mxu0 0.0
          %286 = vmatpush2.msra.mxu0 0.0
          %287 = vmatprep.subr.mxu0 0.0
          %288 = vmatpush2.msra.mxu0 0.0
          %289 = vmatprep.subr.mxu0 0.0
          %290 = vmatpush2.msra.mxu0 0.0
          %291 = vmatprep.subr.mxu0 0.0
          %292 = vmatpush2.msra.mxu0 0.0
          %293 = vmatprep.subr.mxu0 0.0
          %294 = vmatpush2.msra.mxu0 0.0
          %295 = vmatprep.subr.mxu0 0.0
          %296 = vmatpush2.msra.mxu0 0.0
          %297 = vmatprep.subr.mxu0 0.0
          %298 = vmatpush2.msra.mxu0 0.0
          %299 = vmatprep.subr.mxu0 0.0
          %300 = vmatpush2.msra.mxu0 0.0
          %301 = vmatprep.subr.mxu0 0.0
          %302 = vmatpush2.msra.mxu0 0.0
          %303 = vmatprep.subr.mxu0 0.0
          %304 = vmatpush2.msra.mxu0 0.0
          %305 = vmatprep.mubr.f32.mxu0 0.0
          %306 = vmatmul.mubr.f32.gmra.mxu0 %v236
          %v307 = vpop.f32.mrf.mxu0
          %v308 = vadd.f32 %v227, %v307
          %v309 = vpop.f32.mrf.mxu0
          %310 = vmatprep.mubr.f32.mxu0 0.0
          %311 = vmatmul.mubr.f32.gmra.mxu0 %v239
          %v312 = vpop.f32.mrf.mxu0
          %v313 = vadd.f32 %v232, %v312
          %v314 = vpop.f32.mrf.mxu0
          %315 = vdwg.mxu0
          %316 = vmatprep.subr.mxu0 0.0
          %317 = vmatpush1.msra.mxu0 %v214
          %318 = vmatprep.subr.mxu0 0.0
          %319 = vmatpush1.msra.mxu0 %v213
          %320 = vmatprep.subr.mxu0 0.0
          %321 = vmatpush1.msra.mxu0 %v212
          %322 = vmatprep.subr.mxu0 0.0
          %323 = vmatpush1.msra.mxu0 %v211
          %324 = vmatprep.subr.mxu0 0.0
          %325 = vmatpush1.msra.mxu0 %v210
          %326 = vmatprep.subr.mxu0 0.0
          %327 = vmatpush1.msra.mxu0 %v209
          %328 = vmatprep.subr.mxu0 0.0
          %329 = vmatpush1.msra.mxu0 %v208
          %330 = vmatprep.subr.mxu0 0.0
          %331 = vmatpush1.msra.mxu0 %v207
          %332 = vmatprep.subr.mxu0 0.0
          %333 = vmatpush1.msra.mxu0 %v206
          %334 = vmatprep.subr.mxu0 0.0
          %335 = vmatpush1.msra.mxu0 %v205
          %336 = vmatprep.subr.mxu0 0.0
          %337 = vmatpush1.msra.mxu0 %v204
          %338 = vmatprep.subr.mxu0 0.0
          %339 = vmatpush1.msra.mxu0 %v203
          %340 = vmatprep.subr.mxu0 0.0
          %341 = vmatpush1.msra.mxu0 %v202
          %342 = vmatprep.subr.mxu0 0.0
          %343 = vmatpush1.msra.mxu0 %v201
          %344 = vmatprep.subr.mxu0 0.0
          %345 = vmatpush1.msra.mxu0 %v200
          %346 = vmatprep.subr.mxu0 0.0
          %347 = vmatpush1.msra.mxu0 %v199
          %348 = vmatprep.subr.mxu0 0.0
          %349 = vmatpush2.msra.mxu0 0.0
          %350 = vmatprep.subr.mxu0 0.0
          %351 = vmatpush2.msra.mxu0 0.0
          %352 = vmatprep.subr.mxu0 0.0
          %353 = vmatpush2.msra.mxu0 0.0
          %354 = vmatprep.subr.mxu0 0.0
          %355 = vmatpush2.msra.mxu0 0.0
          %356 = vmatprep.subr.mxu0 0.0
          %357 = vmatpush2.msra.mxu0 0.0
          %358 = vmatprep.subr.mxu0 0.0
          %359 = vmatpush2.msra.mxu0 0.0
          %360 = vmatprep.subr.mxu0 0.0
          %361 = vmatpush2.msra.mxu0 0.0
          %362 = vmatprep.subr.mxu0 0.0
          %363 = vmatpush2.msra.mxu0 0.0
          %364 = vmatprep.subr.mxu0 0.0
          %365 = vmatpush2.msra.mxu0 0.0
          %366 = vmatprep.subr.mxu0 0.0
          %367 = vmatpush2.msra.mxu0 0.0
          %368 = vmatprep.subr.mxu0 0.0
          %369 = vmatpush2.msra.mxu0 0.0
          %370 = vmatprep.subr.mxu0 0.0
          %371 = vmatpush2.msra.mxu0 0.0
          %372 = vmatprep.subr.mxu0 0.0
          %373 = vmatpush2.msra.mxu0 0.0
          %374 = vmatprep.subr.mxu0 0.0
          %375 = vmatpush2.msra.mxu0 0.0
          %376 = vmatprep.subr.mxu0 0.0
          %377 = vmatpush2.msra.mxu0 0.0
          %378 = vmatprep.subr.mxu0 0.0
          %379 = vmatpush2.msra.mxu0 0.0
          %380 = vmatprep.mubr.f32.mxu0 0.0
          %381 = vmatmul.mubr.f32.gmra.mxu0 %v219
          %v382 = vpop.f32.mrf.mxu0
          %v383 = vadd.f32 0.0, %v382
          %v384 = vpop.f32.mrf.mxu0
          %385 = vdwg.mxu0
          %386 = vst [vmem:[#allocation2] sm:$0xff] %v383
          %s387 = sadd.s32 %s21, 1
          %s388 = smul.u32 %s387, 16
          %s389 = scalar_lea.vmem %s2, %s388
          %v390 = vld [vmem:[%s389] sm:$0xff]
          %v391 = vld [vmem:[%s389 + $0x8] sm:$0xff]
          %v393 = vsel %vm234, %v390, 0
          %v396 = vsel %vm234, %v391, 0
          %398 = vmatprep.subr.mxu0 0.0
          %399 = vmatpush1.msra.mxu0 0.0
          %400 = vmatprep.subr.mxu0 0.0
          %401 = vmatpush1.msra.mxu0 0.0
          %402 = vmatprep.subr.mxu0 0.0
          %403 = vmatpush1.msra.mxu0 0.0
          %404 = vmatprep.subr.mxu0 0.0
          %405 = vmatpush1.msra.mxu0 0.0
          %406 = vmatprep.subr.mxu0 0.0
          %407 = vmatpush1.msra.mxu0 0.0
          %408 = vmatprep.subr.mxu0 0.0
          %409 = vmatpush1.msra.mxu0 0.0
          %410 = vmatprep.subr.mxu0 0.0
          %411 = vmatpush1.msra.mxu0 0.0
          %412 = vmatprep.subr.mxu0 0.0
          %413 = vmatpush1.msra.mxu0 0.0
          %414 = vmatprep.subr.mxu0 0.0
          %415 = vmatpush1.msra.mxu0 0.0
          %416 = vmatprep.subr.mxu0 0.0
          %417 = vmatpush1.msra.mxu0 0.0
          %418 = vmatprep.subr.mxu0 0.0
          %419 = vmatpush1.msra.mxu0 0.0
          %420 = vmatprep.subr.mxu0 0.0
          %421 = vmatpush1.msra.mxu0 0.0
          %422 = vmatprep.subr.mxu0 0.0
          %423 = vmatpush1.msra.mxu0 0.0
          %424 = vmatprep.subr.mxu0 0.0
          %425 = vmatpush1.msra.mxu0 0.0
          %426 = vmatprep.subr.mxu0 0.0
          %427 = vmatpush1.msra.mxu0 0.0
          %428 = vmatprep.subr.mxu0 0.0
          %429 = vmatpush1.msra.mxu0 %v383
          %430 = vmatprep.subr.mxu0 0.0
          %431 = vmatpush2.msra.mxu0 0.0
          %432 = vmatprep.subr.mxu0 0.0
          %433 = vmatpush2.msra.mxu0 0.0
          %434 = vmatprep.subr.mxu0 0.0
          %435 = vmatpush2.msra.mxu0 0.0
          %436 = vmatprep.subr.mxu0 0.0
          %437 = vmatpush2.msra.mxu0 0.0
          %438 = vmatprep.subr.mxu0 0.0
          %439 = vmatpush2.msra.mxu0 0.0
          %440 = vmatprep.subr.mxu0 0.0
          %441 = vmatpush2.msra.mxu0 0.0
          %442 = vmatprep.subr.mxu0 0.0
          %443 = vmatpush2.msra.mxu0 0.0
          %444 = vmatprep.subr.mxu0 0.0
          %445 = vmatpush2.msra.mxu0 0.0
          %446 = vmatprep.subr.mxu0 0.0
          %447 = vmatpush2.msra.mxu0 0.0
          %448 = vmatprep.subr.mxu0 0.0
          %449 = vmatpush2.msra.mxu0 0.0
          %450 = vmatprep.subr.mxu0 0.0
          %451 = vmatpush2.msra.mxu0 0.0
          %452 = vmatprep.subr.mxu0 0.0
          %453 = vmatpush2.msra.mxu0 0.0
          %454 = vmatprep.subr.mxu0 0.0
          %455 = vmatpush2.msra.mxu0 0.0
          %456 = vmatprep.subr.mxu0 0.0
          %457 = vmatpush2.msra.mxu0 0.0
          %458 = vmatprep.subr.mxu0 0.0
          %459 = vmatpush2.msra.mxu0 0.0
          %460 = vmatprep.subr.mxu0 0.0
          %461 = vmatpush2.msra.mxu0 0.0
          %462 = vmatprep.mubr.f32.mxu0 0.0
          %463 = vmatmul.mubr.f32.gmra.mxu0 %v393
          %v464 = vpop.f32.mrf.mxu0
          %v465 = vadd.f32 0.0, %v464
          %v466 = vpop.f32.mrf.mxu0
          %467 = vmatprep.mubr.f32.mxu0 0.0
          %468 = vmatmul.mubr.f32.gmra.mxu0 %v396
          %v469 = vpop.f32.mrf.mxu0
          %v470 = vadd.f32 0.0, %v469
          %v471 = vpop.f32.mrf.mxu0
          %472 = vdwg.mxu0
          %v473 = vadd.f32 %v308, %v465
          %v474 = vadd.f32 %v313, %v470
          %475 = vst [vmem:[#allocation7] sm:$0xff] %v473
          %476 = vst [vmem:[#allocation7 + $0x8] sm:$0xff] %v474
        $region44: #{tpu_custom_call.1} parent=35 // pred_fallthru
          _
        %p477 = scmp.eq.s32.totalorder %s21, 1
        // Predicated region
        $region45: #{tpu_custom_call.1} parent=35 // pred_check
          %p478 = pneg %p477
        $region46: #{tpu_custom_call.1} parent=35 // pred_check_branch
          %480 = sbr.rel (%p478) target = $region48
        $region47: #{tpu_custom_call.1} parent=35 // pred_region
          %v481 = vld [vmem:[%s0] sm:$0xff]
          %v482 = vmul.f32 %v481, 2.0
          %v483 = vld [vmem:[#allocation7] sm:$0xff]
          %v484 = vld [vmem:[#allocation7 + $0x8] sm:$0xff]
          %v485 = vld [vmem:[#allocation2] sm:$0xff]
          %486 = vmatprep.subr.mxu0 0.0
          %487 = vmatpush1.msra.mxu0 %v214
          %488 = vmatprep.subr.mxu0 0.0
          %489 = vmatpush1.msra.mxu0 %v213
          %490 = vmatprep.subr.mxu0 0.0
          %491 = vmatpush1.msra.mxu0 %v212
          %492 = vmatprep.subr.mxu0 0.0
          %493 = vmatpush1.msra.mxu0 %v211
          %494 = vmatprep.subr.mxu0 0.0
          %495 = vmatpush1.msra.mxu0 %v210
          %496 = vmatprep.subr.mxu0 0.0
          %497 = vmatpush1.msra.mxu0 %v209
          %498 = vmatprep.subr.mxu0 0.0
          %499 = vmatpush1.msra.mxu0 %v208
          %500 = vmatprep.subr.mxu0 0.0
          %501 = vmatpush1.msra.mxu0 %v207
          %502 = vmatprep.subr.mxu0 0.0
          %503 = vmatpush1.msra.mxu0 %v206
          %504 = vmatprep.subr.mxu0 0.0
          %505 = vmatpush1.msra.mxu0 %v205
          %506 = vmatprep.subr.mxu0 0.0
          %507 = vmatpush1.msra.mxu0 %v204
          %508 = vmatprep.subr.mxu0 0.0
          %509 = vmatpush1.msra.mxu0 %v203
          %510 = vmatprep.subr.mxu0 0.0
          %511 = vmatpush1.msra.mxu0 %v202
          %512 = vmatprep.subr.mxu0 0.0
          %513 = vmatpush1.msra.mxu0 %v201
          %514 = vmatprep.subr.mxu0 0.0
          %515 = vmatpush1.msra.mxu0 %v200
          %516 = vmatprep.subr.mxu0 0.0
          %517 = vmatpush1.msra.mxu0 %v199
          %518 = vmatprep.subr.mxu0 0.0
          %519 = vmatpush2.msra.mxu0 0.0
          %520 = vmatprep.subr.mxu0 0.0
          %521 = vmatpush2.msra.mxu0 0.0
          %522 = vmatprep.subr.mxu0 0.0
          %523 = vmatpush2.msra.mxu0 0.0
          %524 = vmatprep.subr.mxu0 0.0
          %525 = vmatpush2.msra.mxu0 0.0
          %526 = vmatprep.subr.mxu0 0.0
          %527 = vmatpush2.msra.mxu0 0.0
          %528 = vmatprep.subr.mxu0 0.0
          %529 = vmatpush2.msra.mxu0 0.0
          %530 = vmatprep.subr.mxu0 0.0
          %531 = vmatpush2.msra.mxu0 0.0
          %532 = vmatprep.subr.mxu0 0.0
          %533 = vmatpush2.msra.mxu0 0.0
          %534 = vmatprep.subr.mxu0 0.0
          %535 = vmatpush2.msra.mxu0 0.0
          %536 = vmatprep.subr.mxu0 0.0
          %537 = vmatpush2.msra.mxu0 0.0
          %538 = vmatprep.subr.mxu0 0.0
          %539 = vmatpush2.msra.mxu0 0.0
          %540 = vmatprep.subr.mxu0 0.0
          %541 = vmatpush2.msra.mxu0 0.0
          %542 = vmatprep.subr.mxu0 0.0
          %543 = vmatpush2.msra.mxu0 0.0
          %544 = vmatprep.subr.mxu0 0.0
          %545 = vmatpush2.msra.mxu0 0.0
          %546 = vmatprep.subr.mxu0 0.0
          %547 = vmatpush2.msra.mxu0 0.0
          %548 = vmatprep.subr.mxu0 0.0
          %549 = vmatpush2.msra.mxu0 0.0
          %550 = vmatprep.mubr.f32.mxu0 0.0
          %551 = vmatmul.mubr.f32.gmra.mxu0 %v485
          %v552 = vpop.f32.mrf.mxu0
          %v553 = vadd.f32 0.0, %v552
          %v554 = vpop.f32.mrf.mxu0
          %555 = vdwg.mxu0
          %v556 = vsub.f32 %v553, %v482
          %557 = vst [vmem:[#allocation3] sm:$0xff] %v556
          %s558 = sadd.s32 %s21, 1
          %s559 = smul.u32 %s558, 16
          %s560 = scalar_lea.vmem %s2, %s559
          %v561 = vld [vmem:[%s560] sm:$0xff]
          %v562 = vld [vmem:[%s560 + $0x8] sm:$0xff]
          %vm563 = vcmask 64512
          %v565 = vsel %vm563, %v561, 0
          %v568 = vsel %vm563, %v562, 0
          %570 = vmatprep.subr.mxu0 0.0
          %571 = vmatpush1.msra.mxu0 0.0
          %572 = vmatprep.subr.mxu0 0.0
          %573 = vmatpush1.msra.mxu0 0.0
          %574 = vmatprep.subr.mxu0 0.0
          %575 = vmatpush1.msra.mxu0 0.0
          %576 = vmatprep.subr.mxu0 0.0
          %577 = vmatpush1.msra.mxu0 0.0
          %578 = vmatprep.subr.mxu0 0.0
          %579 = vmatpush1.msra.mxu0 0.0
          %580 = vmatprep.subr.mxu0 0.0
          %581 = vmatpush1.msra.mxu0 0.0
          %582 = vmatprep.subr.mxu0 0.0
          %583 = vmatpush1.msra.mxu0 0.0
          %584 = vmatprep.subr.mxu0 0.0
          %585 = vmatpush1.msra.mxu0 0.0
          %586 = vmatprep.subr.mxu0 0.0
          %587 = vmatpush1.msra.mxu0 0.0
          %588 = vmatprep.subr.mxu0 0.0
          %589 = vmatpush1.msra.mxu0 0.0
          %590 = vmatprep.subr.mxu0 0.0
          %591 = vmatpush1.msra.mxu0 0.0
          %592 = vmatprep.subr.mxu0 0.0
          %593 = vmatpush1.msra.mxu0 0.0
          %594 = vmatprep.subr.mxu0 0.0
          %595 = vmatpush1.msra.mxu0 0.0
          %596 = vmatprep.subr.mxu0 0.0
          %597 = vmatpush1.msra.mxu0 0.0
          %598 = vmatprep.subr.mxu0 0.0
          %599 = vmatpush1.msra.mxu0 0.0
          %600 = vmatprep.subr.mxu0 0.0
          %601 = vmatpush1.msra.mxu0 %v556
          %602 = vmatprep.subr.mxu0 0.0
          %603 = vmatpush2.msra.mxu0 0.0
          %604 = vmatprep.subr.mxu0 0.0
          %605 = vmatpush2.msra.mxu0 0.0
          %606 = vmatprep.subr.mxu0 0.0
          %607 = vmatpush2.msra.mxu0 0.0
          %608 = vmatprep.subr.mxu0 0.0
          %609 = vmatpush2.msra.mxu0 0.0
          %610 = vmatprep.subr.mxu0 0.0
          %611 = vmatpush2.msra.mxu0 0.0
          %612 = vmatprep.subr.mxu0 0.0
          %613 = vmatpush2.msra.mxu0 0.0
          %614 = vmatprep.subr.mxu0 0.0
          %615 = vmatpush2.msra.mxu0 0.0
          %616 = vmatprep.subr.mxu0 0.0
          %617 = vmatpush2.msra.mxu0 0.0
          %618 = vmatprep.subr.mxu0 0.0
          %619 = vmatpush2.msra.mxu0 0.0
          %620 = vmatprep.subr.mxu0 0.0
          %621 = vmatpush2.msra.mxu0 0.0
          %622 = vmatprep.subr.mxu0 0.0
          %623 = vmatpush2.msra.mxu0 0.0
          %624 = vmatprep.subr.mxu0 0.0
          %625 = vmatpush2.msra.mxu0 0.0
          %626 = vmatprep.subr.mxu0 0.0
          %627 = vmatpush2.msra.mxu0 0.0
          %628 = vmatprep.subr.mxu0 0.0
          %629 = vmatpush2.msra.mxu0 0.0
          %630 = vmatprep.subr.mxu0 0.0
          %631 = vmatpush2.msra.mxu0 0.0
          %632 = vmatprep.subr.mxu0 0.0
          %633 = vmatpush2.msra.mxu0 0.0
          %634 = vmatprep.mubr.f32.mxu0 0.0
          %635 = vmatmul.mubr.f32.gmra.mxu0 %v565
          %v636 = vpop.f32.mrf.mxu0
          %v637 = vadd.f32 0.0, %v636
          %v638 = vpop.f32.mrf.mxu0
          %639 = vmatprep.mubr.f32.mxu0 0.0
          %640 = vmatmul.mubr.f32.gmra.mxu0 %v568
          %v641 = vpop.f32.mrf.mxu0
          %v642 = vadd.f32 0.0, %v641
          %v643 = vpop.f32.mrf.mxu0
          %644 = vdwg.mxu0
          %v645 = vadd.f32 %v483, %v637
          %v646 = vadd.f32 %v484, %v642
          %647 = vst [vmem:[#allocation7] sm:$0xff] %v645
          %648 = vst [vmem:[#allocation7 + $0x8] sm:$0xff] %v646
        $region48: #{tpu_custom_call.1} parent=35 // pred_fallthru
          _
        // Predicated region
        $region49: #{tpu_custom_call.1} parent=35 // pred_check
          %p649 = pneg %p131
        $region50: #{tpu_custom_call.1} parent=35 // pred_check_branch
          %651 = sbr.rel (%p649) target = $region52
        $region51: #{tpu_custom_call.1} parent=35 // pred_region
          %s653 = ssub.s32 256, 256
          %654 = vsyncadd [#allocation6], %s653
          %s655 = sshll.u32 [#allocation7], 4
          %s656 = int_to_ptr.vmem [resolvable:$true] %s655
          %661 = dma.vmem_to_hbm [thread:$0]  %s656, 256, %s4, [#allocation6], 128, 128, 8
        $region52: #{tpu_custom_call.1} parent=35 // pred_fallthru
          _
        // Predicated region
        $region53: #{tpu_custom_call.1} parent=35 // pred_check
          %p662 = pneg %p131
        $region54: #{tpu_custom_call.1} parent=35 // pred_check_branch
          %664 = sbr.rel (%p662) target = $region56
        $region55: #{tpu_custom_call.1} parent=35 // pred_region
          %665 = dma.done [#allocation6], 256
        $region56: #{tpu_custom_call.1} parent=35 // pred_fallthru
          _
      $region36: #{tpu_custom_call.1} parent=5 // pred_fallthru
        _
      %p666 = scmp.le.s32.totalorder 2, %s12
      // Predicated region
      $region57: #{tpu_custom_call.1} parent=5 // pred_check
        %p667 = pneg %p666
      $region58: #{tpu_custom_call.1} parent=5 // pred_check_branch
        %669 = sbr.rel (%p667) target = $region60
      $region59: #{tpu_custom_call.1} parent=5 // pred_region
        %s670 = ssub.s32 %s12, 2
      $region60: #{tpu_custom_call.1} parent=5 // pred_fallthru
        _
    $region6: #{tpu_custom_call.1} parent=1 // loop_footer
      %s16 = sadd.s32 1, %s12
    $region7: #{tpu_custom_call.1} parent=1 // loop_footer_branch
      %11 = sbr.rel target = $region3
    $region8: #{tpu_custom_call.1} parent=1 // loop_exit
      _
    %671 = vsyncpa [#allocation5], 1
    %s672 = scalar_lea.sflag [#allocation5], 1
    %673 = vsyncpa %s672, 1
    %674 = vsyncpa [#allocation6], 1
    %s675 = scalar_lea.sflag [#allocation6], 1
    %676 = vsyncpa %s675, 1

</llo_original>
